<compile_context>
chip_gen: v5e
topology: v5e:2x2
jax: 0.10.0
libtpu: 0.0.40
codegen_flags: <defaults>
</compile_context>

<pallas_src>
import functools

import jax
import jax.numpy as jnp
from jax.experimental import pallas as pl
from jax.experimental.pallas import tpu as pltpu


def _round_up(x, m):
    return (x + m - 1) // m * m


# ----------------------------------------------------------------------------
# Hardware-dependent knobs (with safe fallbacks).
# ----------------------------------------------------------------------------
def _vmem_limit_bytes():
    try:
        cap = pltpu.get_tpu_info().vmem_capacity_bytes
    except Exception:
        cap = 64 * 1024 * 1024
    if cap >= 128 * 1024 * 1024:      # v5e / v6e: 128 MiB physical
        return 96 * 1024 * 1024
    return 48 * 1024 * 1024           # v7x: 64 MiB physical


_BUFFERED_OK = None


def _buffered_single_ok():
    """Probe whether pipeline_mode=pl.Buffered(1) works end-to-end."""
    global _BUFFERED_OK
    if _BUFFERED_OK is not None:
        return _BUFFERED_OK
    try:
        def _k(x_ref, o_ref):
            o_ref[...] = x_ref[...]

        spec = pl.BlockSpec((8, 128), lambda i: (0, 0),
                            pipeline_mode=pl.Buffered(1))
        out = pl.pallas_call(
            _k,
            out_shape=jax.ShapeDtypeStruct((8, 128), jnp.float32),
            grid=(1,),
            in_specs=[spec],
            out_specs=pl.BlockSpec((8, 128), lambda i: (0, 0)),
        )(jnp.zeros((8, 128), jnp.float32))
        jax.block_until_ready(out)
        _BUFFERED_OK = True
    except Exception:
        _BUFFERED_OK = False
    return _BUFFERED_OK


def _resident_spec(shape, index_map):
    """Constant-index (VMEM-resident) operand; single-buffer when supported."""
    if _buffered_single_ok():
        return pl.BlockSpec(shape, index_map, pipeline_mode=pl.Buffered(1))
    return pl.BlockSpec(shape, index_map)


# ----------------------------------------------------------------------------
# Fused kernel (A_hat VMEM-resident, single grid step):
#   out = A @ (relu((A @ x) W1 + b1) @ W2) + b2
# ----------------------------------------------------------------------------
def _gcn_fused_kernel(a_ref, x_ref, w1_ref, b1_ref, w2_ref, b2_ref, out_ref,
                      *, in_channels):
    a = a_ref[...]                                                  # [N, N] bf16
    a1 = jnp.dot(a, x_ref[...], preferred_element_type=jnp.float32)  # [N, cin]
    if in_channels == 1:
        # Rank-1 transform: VPU broadcast outer product (no K=1 MXU matmul).
        z = a1 * w1_ref[...] + b1_ref[...]                          # [N, H_pad]
    else:
        z = jnp.dot(a1, w1_ref[...],
                    preferred_element_type=jnp.float32) + b1_ref[...]
    h1 = jnp.maximum(z, 0.0)
    hw2 = jnp.dot(h1.astype(jnp.bfloat16), w2_ref[...],
                  preferred_element_type=jnp.float32)               # [N, C_pad]
    out_ref[...] = jnp.dot(a, hw2.astype(jnp.bfloat16),
                           preferred_element_type=jnp.float32) + b2_ref[...]


# ----------------------------------------------------------------------------
# Streamed layer 1: hw2 = relu((A @ x) W1 + b1) @ W2      (x VMEM-resident)
# Grid = (row tiles i, reduction tiles k over A_hat columns).
# ----------------------------------------------------------------------------
def _gcn_layer1_kernel(a_ref, x_ref, w1_ref, b1_ref, w2_ref, hw2_ref, acc_ref,
                       *, tk, in_channels):
    k = pl.program_id(1)

    @pl.when(k == 0)
    def _():
        acc_ref[...] = jnp.zeros_like(acc_ref)

    start = pl.multiple_of(k * tk, tk)
    acc_ref[...] += jnp.dot(a_ref[...], x_ref[pl.ds(start, tk), :],
                            preferred_element_type=jnp.float32)

    @pl.when(k == pl.num_programs(1) - 1)
    def _():
        a1 = acc_ref[...]                                           # [tm, cin]
        if in_channels == 1:
            z = a1 * w1_ref[...] + b1_ref[...]                      # rank-1 (VPU)
        else:
            z = jnp.dot(a1, w1_ref[...],
                        preferred_element_type=jnp.float32) + b1_ref[...]
        h1 = jnp.maximum(z, 0.0)
        hw2_ref[...] = jnp.dot(
            h1.astype(jnp.bfloat16), w2_ref[...],
            preferred_element_type=jnp.float32).astype(hw2_ref.dtype)


# ----------------------------------------------------------------------------
# Streamed layer 2: out = A @ hw2 + b2          (hw2 VMEM-resident, A streamed)
# ----------------------------------------------------------------------------
def _gcn_layer2_kernel(a_ref, hw2_ref, b2_ref, out_ref, acc_ref, *, tk):
    k = pl.program_id(1)

    @pl.when(k == 0)
    def _():
        acc_ref[...] = jnp.zeros_like(acc_ref)

    start = pl.multiple_of(k * tk, tk)
    acc_ref[...] += jnp.dot(a_ref[...], hw2_ref[pl.ds(start, tk), :],
                            preferred_element_type=jnp.float32)

    @pl.when(k == pl.num_programs(1) - 1)
    def _():
        out_ref[...] = acc_ref[...] + b2_ref[...]


# ----------------------------------------------------------------------------
# Normalized adjacency, built directly at padded size / target dtype.
# ----------------------------------------------------------------------------
def _normalized_adjacency_padded(edge_index, num_nodes, n_pad,
                                 dtype=jnp.bfloat16):
    """Dense padded D^{-1/2}(A + I_missing)D^{-1/2} (PyG gcn_norm semantics).

    Built at the padded size so no separate O(N^2) pad/cast pass is needed.
    Padding rows/cols have zero degree -> zero rows/cols (no contamination).
    """
    src, dst = edge_index[0], edge_index[1]
    adj = jnp.zeros((n_pad, n_pad), jnp.float32)
    adj = adj.at[dst, src].add(1.0)              # message flow src -> dst
    idx = jnp.arange(n_pad)
    diag = jnp.diagonal(adj)
    # add_remaining_self_loops: only for *real* nodes missing a self loop.
    adj = adj + jnp.diag(jnp.where((diag == 0.0) & (idx < num_nodes), 1.0, 0.0))
    deg = adj.sum(axis=1)
    dinv = jnp.where(deg > 0.0, jax.lax.rsqrt(deg), 0.0)
    return (dinv[:, None] * adj * dinv[None, :]).astype(dtype)


# ----------------------------------------------------------------------------
# Forward wrapper.
# ----------------------------------------------------------------------------
def gnn_forward(edge_index, x, w1, b1, w2, b2, *, force_streamed=False):
    n, cin = x.shape
    hidden = w1.shape[1]
    out_channels = w2.shape[1]

    h_pad = _round_up(hidden, 128)
    c_pad = _round_up(out_channels, 128)
    f32, bf16 = jnp.float32, jnp.bfloat16
    vmem_limit = _vmem_limit_bytes()

    # ---- layout selection: fused (A resident) vs streamed ------------------
    n_pad_fused = max(_round_up(n, 128), 128)
    a_bytes = 2 * n_pad_fused * n_pad_fused
    buf_factor = 1 if _buffered_single_ok() else 2
    fused = (not force_streamed) and (
        buf_factor * a_bytes + (8 << 20) <= int(0.6 * vmem_limit))

    if fused:
        n_pad, tm, tk = n_pad_fused, None, None
    else:
        tm = 512
        n_pad = _round_up(n, 512)
        tk = 1024 if n_pad % 1024 == 0 else 512

    adj_p = _normalized_adjacency_padded(edge_index, n, n_pad, dtype=bf16)

    x_p = jnp.zeros((n_pad, cin), bf16).at[:n, :].set(x.astype(bf16))
    w1_p = jnp.zeros((cin, h_pad), f32).at[:, :hidden].set(w1.astype(f32))
    b1_p = jnp.zeros((1, h_pad), f32).at[:, :hidden].set(
        b1.reshape(1, -1).astype(f32))
    w2_p = jnp.zeros((h_pad, c_pad), bf16).at[:hidden, :out_channels].set(
        w2.astype(bf16))
    b2_p = jnp.zeros((1, c_pad), f32).at[:, :out_channels].set(
        b2.reshape(1, -1).astype(f32))

    if fused:
        # TODO(synk): on v7x a single grid step uses one TensorCore; for
        # mid-sized fused graphs split row tiles (recomputing hw2 per tile) to
        # engage both cores.
        out_p = pl.pallas_call(
            functools.partial(_gcn_fused_kernel, in_channels=cin),
            out_shape=jax.ShapeDtypeStruct((n_pad, c_pad), f32),
            grid_spec=pltpu.PrefetchScalarGridSpec(
                num_scalar_prefetch=0,
                grid=(1,),
                in_specs=[
                    _resident_spec((n_pad, n_pad), lambda i: (0, 0)),  # A_hat
                    _resident_spec((n_pad, cin), lambda i: (0, 0)),    # x
                    _resident_spec((cin, h_pad), lambda i: (0, 0)),    # W1
                    _resident_spec((1, h_pad), lambda i: (0, 0)),      # b1
                    _resident_spec((h_pad, c_pad), lambda i: (0, 0)),  # W2
                    _resident_spec((1, c_pad), lambda i: (0, 0)),      # b2
                ],
                out_specs=pl.BlockSpec((n_pad, c_pad), lambda i: (0, 0)),
            ),
            compiler_params=pltpu.CompilerParams(
                dimension_semantics=("arbitrary",),
                vmem_limit_bytes=vmem_limit,
            ),
            cost_estimate=pl.CostEstimate(
                flops=2 * n_pad * n_pad * (cin + c_pad)
                      + 2 * n_pad * h_pad * c_pad,
                transcendentals=0,
                bytes_accessed=2 * n_pad * n_pad + 4 * n_pad * c_pad
                               + 2 * n_pad * cin + 2 * h_pad * c_pad,
            ),
        )(adj_p, x_p, w1_p, b1_p, w2_p, b2_p)
        return out_p[:n, :out_channels]

    # ---- streamed two-pass path (large graphs) ------------------------------
    grid = (n_pad // tm, n_pad // tk)
    compiler_params = pltpu.CompilerParams(
        dimension_semantics=("parallel", "arbitrary"),
        vmem_limit_bytes=vmem_limit,
    )

    hw2 = pl.pallas_call(
        functools.partial(_gcn_layer1_kernel, tk=tk, in_channels=cin),
        out_shape=jax.ShapeDtypeStruct((n_pad, c_pad), bf16),
        grid_spec=pltpu.PrefetchScalarGridSpec(
            num_scalar_prefetch=0,
            grid=grid,
            in_specs=[
                pl.BlockSpec((tm, tk), lambda i, k: (i, k)),           # A (streamed)
                _resident_spec((n_pad, cin), lambda i, k: (0, 0)),     # x (resident)
                _resident_spec((cin, h_pad), lambda i, k: (0, 0)),     # W1
                _resident_spec((1, h_pad), lambda i, k: (0, 0)),       # b1
                _resident_spec((h_pad, c_pad), lambda i, k: (0, 0)),   # W2
            ],
            out_specs=pl.BlockSpec((tm, c_pad), lambda i, k: (i, 0)),
            scratch_shapes=[pltpu.VMEM((tm, cin), f32)],
        ),
        compiler_params=compiler_params,
        cost_estimate=pl.CostEstimate(
            flops=2 * n_pad * n_pad * cin + 2 * n_pad * h_pad * c_pad,
            transcendentals=0,
            bytes_accessed=2 * n_pad * n_pad + 2 * n_pad * (cin + c_pad)
                           + 2 * h_pad * c_pad,
        ),
    )(adj_p, x_p, w1_p, b1_p, w2_p)

    # TODO(synk): switch hw2 to a streamed (tk, c_pad) k-indexed BlockSpec once
    # n_pad*c_pad*2 bytes no longer fits comfortably in VMEM (very large N).
    out_p = pl.pallas_call(
        functools.partial(_gcn_layer2_kernel, tk=tk),
        out_shape=jax.ShapeDtypeStruct((n_pad, c_pad), f32),
        grid_spec=pltpu.PrefetchScalarGridSpec(
            num_scalar_prefetch=0,
            grid=grid,
            in_specs=[
                pl.BlockSpec((tm, tk), lambda i, k: (i, k)),           # A (streamed)
                _resident_spec((n_pad, c_pad), lambda i, k: (0, 0)),   # hw2 (resident)
                _resident_spec((1, c_pad), lambda i, k: (0, 0)),       # b2
            ],
            out_specs=pl.BlockSpec((tm, c_pad), lambda i, k: (i, 0)),
            scratch_shapes=[pltpu.VMEM((tm, c_pad), f32)],
        ),
        compiler_params=compiler_params,
        cost_estimate=pl.CostEstimate(
            flops=2 * n_pad * n_pad * c_pad,
            transcendentals=0,
            bytes_accessed=2 * n_pad * n_pad + 6 * n_pad * c_pad,
        ),
    )(adj_p, hw2, b2_p)

    return out_p[:n, :out_channels]


def init_params(key, in_channels, hidden, out_channels):
    k1, k2, k3, k4 = jax.random.split(key, 4)
    w1 = jax.random.normal(k1, (in_channels, hidden), jnp.float32) * (
        1.0 / jnp.sqrt(jnp.float32(in_channels + hidden)))
    w2 = jax.random.normal(k2, (hidden, out_channels), jnp.float32) * (
        1.0 / jnp.sqrt(jnp.float32(hidden + out_channels)))
    # GCNConv default bias init is zeros; use small non-zero biases so the
    # bias-add path is actually exercised by the checks below.
    b1 = jax.random.normal(k3, (1, hidden), jnp.float32) * 0.05
    b2 = jax.random.normal(k4, (1, out_channels), jnp.float32) * 0.05
    return w1, b1, w2, b2


if __name__ == "__main__":
    key = jax.random.PRNGKey(0)
    k_edges, k_x, k_params = jax.random.split(key, 3)

    num_nodes = 16        # departments
    num_edges = 48        # collaboration edges
    in_channels = 1       # centrality feature -> x.view(-1, 1)
    hidden = 64
    out_channels = 4

    edge_index = jax.random.randint(
        k_edges, (2, num_edges), minval=0, maxval=num_nodes, dtype=jnp.int32)
    x = jax.random.uniform(k_x, (num_nodes, in_channels), jnp.float32)
    w1, b1, w2, b2 = init_params(k_params, in_channels, hidden, out_channels)

    # Fused (A_hat VMEM-resident, single pallas_call) path — the demo size.
    out = gnn_forward(edge_index, x, w1, b1, w2, b2)
    jax.block_until_ready(out)
    assert out.shape == (num_nodes, out_channels)

    # Also exercise the streamed two-pass (large-graph) code path.
    out_streamed = gnn_forward(edge_index, x, w1, b1, w2, b2,
                               force_streamed=True)
    jax.block_until_ready(out_streamed)
    assert out_streamed.shape == (num_nodes, out_channels)

    f32, bf16 = jnp.float32, jnp.bfloat16
    adj_f32 = _normalized_adjacency_padded(
        edge_index, num_nodes, max(_round_up(num_nodes, 128), 128),
        dtype=f32)[:num_nodes, :num_nodes]

    # Reference 1: mirrors the kernel's bf16 rounding points (tight-ish check).
    adj_bf = adj_f32.astype(bf16).astype(f32)
    x_bf = x.astype(bf16).astype(f32)
    w2_bf = w2.astype(bf16).astype(f32)
    a1 = adj_bf @ x_bf
    h1 = jnp.maximum(a1 * w1 + b1, 0.0).astype(bf16).astype(f32)
    hw2_ref = (h1 @ w2_bf).astype(bf16).astype(f32)
    ref_mirror = adj_bf @ hw2_ref + b2
    assert jnp.allclose(out, ref_mirror, atol=2e-2, rtol=2e-2), float(
        jnp.max(jnp.abs(out - ref_mirror)))
    assert jnp.allclose(out_streamed, ref_mirror, atol=2e-2, rtol=2e-2), float(
        jnp.max(jnp.abs(out_streamed - ref_mirror)))

    # Reference 2: full-f32 math in the original GCNConv ordering (loose check,
    # bounds the bf16 quantization of the fast path).
    ref_f32 = adj_f32 @ (jnp.maximum(adj_f32 @ (x @ w1) + b1, 0.0) @ w2) + b2
    assert jnp.allclose(out, ref_f32, atol=5e-2, rtol=5e-2), float(
        jnp.max(jnp.abs(out - ref_f32)))
    assert jnp.allclose(out_streamed, ref_f32, atol=5e-2, rtol=5e-2), float(
        jnp.max(jnp.abs(out_streamed - ref_f32)))

    print("KERNEL_OK")
</pallas_src>

<mosaic_0001>
module attributes {stable_mosaic.version = 11 : i64} {
  func.func @_k(%arg0: i32, %arg1: memref<8x128xf32, #tpu.memory_space<vmem>>, %arg2: memref<8x128xf32, #tpu.memory_space<vmem>>) attributes {dimension_semantics = [#tpu.dimension_semantics<arbitrary>], iteration_bounds = array<i64: 1>, scalar_prefetch = 0 : i64, scratch_operands = 0 : i64, tpu.core_type = #tpu.core_type<tc>, window_params = [{pipeline_mode = #tpu.pipeline_mode<synchronous>, transform_indices = @transform_0, window_bounds = array<i64: 8, 128>}, {pipeline_mode = #tpu.pipeline_mode<synchronous>, transform_indices = @transform_1, window_bounds = array<i64: 8, 128>}]} {
    %c0 = arith.constant 0 : index
    %c0_0 = arith.constant 0 : index
    %0 = vector.load %arg1[%c0, %c0_0] : memref<8x128xf32, #tpu.memory_space<vmem>>, vector<8x128xf32>
    %c0_1 = arith.constant 0 : index
    %c0_2 = arith.constant 0 : index
    %1 = vector.load %arg2[%c0_1, %c0_2] : memref<8x128xf32, #tpu.memory_space<vmem>>, vector<8x128xf32>
    tpu.vector_store %arg2[%c0_1, %c0_2], %0 {strides = array<i32>} : memref<8x128xf32, #tpu.memory_space<vmem>>, vector<8x128xf32>,
    return
  }
  func.func @transform_0(%arg0: i32) -> (i32, i32) {
    %c0_i32 = arith.constant 0 : i32
    %c0_i32_0 = arith.constant 0 : i32
    %c0_i32_1 = arith.constant 0 : i32
    return %c0_i32, %c0_i32_0 : i32, i32
  }
  func.func @transform_1(%arg0: i32) -> (i32, i32) {
    %c0_i32 = arith.constant 0 : i32
    %c0_i32_0 = arith.constant 0 : i32
    %c0_i32_1 = arith.constant 0 : i32
    return %c0_i32, %c0_i32_0 : i32, i32
  }
}

module attributes {stable_mosaic.version = 11 : i64} {
  func.func @_gcn_fused_kernel(%arg0: i32, %arg1: memref<128x128xbf16, #tpu.memory_space<vmem>>, %arg2: memref<128x1xbf16, #tpu.memory_space<vmem>>, %arg3: memref<1x128xf32, #tpu.memory_space<vmem>>, %arg4: memref<1x128xf32, #tpu.memory_space<vmem>>, %arg5: memref<128x128xbf16, #tpu.memory_space<vmem>>, %arg6: memref<1x128xf32, #tpu.memory_space<vmem>>, %arg7: memref<128x128xf32, #tpu.memory_space<vmem>>) attributes {dimension_semantics = [#tpu.dimension_semantics<arbitrary>], iteration_bounds = array<i64: 1>, scalar_prefetch = 0 : i64, scratch_operands = 0 : i64, tpu.core_type = #tpu.core_type<tc>, window_params = [{pipeline_mode = #tpu.pipeline_mode<synchronous>, transform_indices = @transform_0, window_bounds = array<i64: 128, 128>}, {pipeline_mode = #tpu.pipeline_mode<synchronous>, transform_indices = @transform_1, window_bounds = array<i64: 128, 1>}, {pipeline_mode = #tpu.pipeline_mode<synchronous>, transform_indices = @transform_2, window_bounds = array<i64: 1, 128>}, {pipeline_mode = #tpu.pipeline_mode<synchronous>, transform_indices = @transform_3, window_bounds = array<i64: 1, 128>}, {pipeline_mode = #tpu.pipeline_mode<synchronous>, transform_indices = @transform_4, window_bounds = array<i64: 128, 128>}, {pipeline_mode = #tpu.pipeline_mode<synchronous>, transform_indices = @transform_5, window_bounds = array<i64: 1, 128>}, {pipeline_mode = #tpu.pipeline_mode<synchronous>, transform_indices = @transform_6, window_bounds = array<i64: 128, 128>}]} {
    %c0 = arith.constant 0 : index
    %c0_0 = arith.constant 0 : index
    %0 = vector.load %arg1[%c0, %c0_0] : memref<128x128xbf16, #tpu.memory_space<vmem>>, vector<128x128xbf16>
    %c0_1 = arith.constant 0 : index
    %c0_2 = arith.constant 0 : index
    %1 = vector.load %arg2[%c0_1, %c0_2] : memref<128x1xbf16, #tpu.memory_space<vmem>>, vector<128x1xbf16>
    %cst = arith.constant dense<0.000000e+00> : vector<128x1xf32>
    %2 = tpu.matmul %0, %1, %cst {dimension_numbers = #tpu.dot_dimension_numbers<[1], [0], [0], [1], [0, 0, 1, 1], [], []>} : vector<128x128xbf16>, vector<128x1xbf16>, vector<128x1xf32> -> vector<128x1xf32>
    %c0_3 = arith.constant 0 : index
    %c0_4 = arith.constant 0 : index
    %3 = vector.load %arg3[%c0_3, %c0_4] : memref<1x128xf32, #tpu.memory_space<vmem>>, vector<1x128xf32>
    %4 = vector.broadcast %2 : vector<128x1xf32> to vector<128x128xf32>
    %5 = vector.broadcast %3 : vector<1x128xf32> to vector<128x128xf32>
    %6 = arith.mulf %4, %5 : vector<128x128xf32>
    %c0_5 = arith.constant 0 : index
    %c0_6 = arith.constant 0 : index
    %7 = vector.load %arg4[%c0_5, %c0_6] : memref<1x128xf32, #tpu.memory_space<vmem>>, vector<1x128xf32>
    %8 = vector.broadcast %7 : vector<1x128xf32> to vector<128x128xf32>
    %9 = arith.addf %6, %8 : vector<128x128xf32>
    %cst_7 = arith.constant 0.000000e+00 : f32
    %10 = vector.broadcast %cst_7 : f32 to vector<128x128xf32>
    %11 = arith.maximumf %9, %10 : vector<128x128xf32>
    %12 = arith.truncf %11 : vector<128x128xf32> to vector<128x128xbf16>
    %c0_8 = arith.constant 0 : index
    %c0_9 = arith.constant 0 : index
    %13 = vector.load %arg5[%c0_8, %c0_9] : memref<128x128xbf16, #tpu.memory_space<vmem>>, vector<128x128xbf16>
    %cst_10 = arith.constant dense<0.000000e+00> : vector<128x128xf32>
    %14 = tpu.matmul %12, %13, %cst_10 {dimension_numbers = #tpu.dot_dimension_numbers<[1], [0], [0], [1], [0, 0, 1, 1], [], []>} : vector<128x128xbf16>, vector<128x128xbf16>, vector<128x128xf32> -> vector<128x128xf32>
    %15 = arith.truncf %14 : vector<128x128xf32> to vector<128x128xbf16>
    %cst_11 = arith.constant dense<0.000000e+00> : vector<128x128xf32>
    %16 = tpu.matmul %0, %15, %cst_11 {dimension_numbers = #tpu.dot_dimension_numbers<[1], [0], [0], [1], [0, 0, 1, 1], [], []>} : vector<128x128xbf16>, vector<128x128xbf16>, vector<128x128xf32> -> vector<128x128xf32>
    %c0_12 = arith.constant 0 : index
    %c0_13 = arith.constant 0 : index
    %17 = vector.load %arg6[%c0_12, %c0_13] : memref<1x128xf32, #tpu.memory_space<vmem>>, vector<1x128xf32>
    %18 = vector.broadcast %17 : vector<1x128xf32> to vector<128x128xf32>
    %19 = arith.addf %16, %18 : vector<128x128xf32>
    %c0_14 = arith.constant 0 : index
    %c0_15 = arith.constant 0 : index
    %20 = vector.load %arg7[%c0_14, %c0_15] : memref<128x128xf32, #tpu.memory_space<vmem>>, vector<128x128xf32>
    tpu.vector_store %arg7[%c0_14, %c0_15], %19 {strides = array<i32>} : memref<128x128xf32, #tpu.memory_space<vmem>>, vector<128x128xf32>,
    return
  }
  func.func @transform_0(%arg0: i32) -> (i32, i32) {
    %c0_i32 = arith.constant 0 : i32
    %c0_i32_0 = arith.constant 0 : i32
    %c0_i32_1 = arith.constant 0 : i32
    return %c0_i32, %c0_i32_0 : i32, i32
  }
  func.func @transform_1(%arg0: i32) -> (i32, i32) {
    %c0_i32 = arith.constant 0 : i32
    %c0_i32_0 = arith.constant 0 : i32
    %c0_i32_1 = arith.constant 0 : i32
    return %c0_i32, %c0_i32_0 : i32, i32
  }
  func.func @transform_2(%arg0: i32) -> (i32, i32) {
    %c0_i32 = arith.constant 0 : i32
    %c0_i32_0 = arith.constant 0 : i32
    %c0_i32_1 = arith.constant 0 : i32
    return %c0_i32, %c0_i32_0 : i32, i32
  }
  func.func @transform_3(%arg0: i32) -> (i32, i32) {
    %c0_i32 = arith.constant 0 : i32
    %c0_i32_0 = arith.constant 0 : i32
    %c0_i32_1 = arith.constant 0 : i32
    return %c0_i32, %c0_i32_0 : i32, i32
  }
  func.func @transform_4(%arg0: i32) -> (i32, i32) {
    %c0_i32 = arith.constant 0 : i32
    %c0_i32_0 = arith.constant 0 : i32
    %c0_i32_1 = arith.constant 0 : i32
    return %c0_i32, %c0_i32_0 : i32, i32
  }
  func.func @transform_5(%arg0: i32) -> (i32, i32) {
    %c0_i32 = arith.constant 0 : i32
    %c0_i32_0 = arith.constant 0 : i32
    %c0_i32_1 = arith.constant 0 : i32
    return %c0_i32, %c0_i32_0 : i32, i32
  }
  func.func @transform_6(%arg0: i32) -> (i32, i32) {
    %c0_i32 = arith.constant 0 : i32
    %c0_i32_0 = arith.constant 0 : i32
    %c0_i32_1 = arith.constant 0 : i32
    return %c0_i32, %c0_i32_0 : i32, i32
  }
}

</mosaic_0001>

<llo_original>
// kernel: tpu_custom_call.1
$region0: #{tpu_custom_call.1}
  #allocation0 [shape = 'u32[]', space=smem, size = 0x4, offset = 0x4, fixed_abs, tag = 'smem constant byte address 0x4 - core index']
  #allocation1 [shape = 'u32[72,128]{1,0:T(1,128)}', space=vmem, size = 0x9000, scoped, tag = 'internal scratch']
  %s0 = inlined_call_operand.hbm [shape: f32[8,128], index: 0, kind: input, shape index: {}]
  %s1 = inlined_call_operand.hbm [shape: f32[8,128], index: 1, kind: output, shape index: {}]
  %s2 = sld [smem:[#allocation0]]
  $region18: #{tpu_custom_call.1} parent=0
    _
  %s4 = ssub.s32 1, %s2
  %s5 = scalar_select 0, %s4, %s2
  $region1: #{tpu_custom_call.1} parent=0
    #allocation2 [shape = 'u8[4096]{0}', space=vmem, size = 0x1000, scoped, tag = 'input window, operand 0, single buffered']
    #allocation3 [shape = 's32[1]{0}', space=sflag, size = 0x4, scoped, tag = 'scoped memory for tpu_custom_call.1']
    #allocation4 [shape = 's32[1]{0}', space=sflag, size = 0x4, scoped, tag = 'scoped memory for tpu_custom_call.1']
    #allocation5 [shape = 'u8[4096]{0}', space=vmem, size = 0x1000, scoped, tag = 'output window, operand 0, single buffered']
    %6 = vsyncpa [#allocation3], 0
    %7 = vsyncpa [#allocation4], 0
    // Predicated region
    $region2: #{tpu_custom_call.1} parent=1 // pred_check
      _
    $region3: #{tpu_custom_call.1} parent=1 // pred_check_branch
      %9 = sbr.rel (0) target = $region5
    $region4: #{tpu_custom_call.1} parent=1 // pred_region
      %11 = vsyncadd [#allocation3], 0
      %s13 = sshll.u32 %s0, 4
      %s14 = int_to_ptr.hbm [resolvable:$true] %s13
      %s15 = sshll.u32 [#allocation2], 4
      %s16 = int_to_ptr.vmem [resolvable:$true] %s15
      %18 = dma.hbm_to_vmem [thread:$0]  %s14, 128, %s16, [#allocation3]
    $region5: #{tpu_custom_call.1} parent=1 // pred_fallthru
      _
    // Predicated region
    $region6: #{tpu_custom_call.1} parent=1 // pred_check
      _
    $region7: #{tpu_custom_call.1} parent=1 // pred_check_branch
      %20 = sbr.rel (0) target = $region9
    $region8: #{tpu_custom_call.1} parent=1 // pred_region
      %22 = dma.done [#allocation3], 128
    $region9: #{tpu_custom_call.1} parent=1 // pred_fallthru
      _
    %v23 = vld [vmem:[#allocation2] sm:$0xff]
    %24 = vst [vmem:[#allocation5] sm:$0xff] %v23
    // Predicated region
    $region10: #{tpu_custom_call.1} parent=1 // pred_check
      _
    $region11: #{tpu_custom_call.1} parent=1 // pred_check_branch
      %26 = sbr.rel (0) target = $region13
    $region12: #{tpu_custom_call.1} parent=1 // pred_region
      %28 = vsyncadd [#allocation4], 0
      %s30 = sshll.u32 [#allocation5], 4
      %s31 = int_to_ptr.vmem [resolvable:$true] %s30
      %s32 = sshll.u32 %s1, 4
      %s33 = int_to_ptr.hbm [resolvable:$true] %s32
      %35 = dma.vmem_to_hbm [thread:$0]  %s31, 128, %s33, [#allocation4]
    $region13: #{tpu_custom_call.1} parent=1 // pred_fallthru
      _
    // Predicated region
    $region14: #{tpu_custom_call.1} parent=1 // pred_check
      _
    $region15: #{tpu_custom_call.1} parent=1 // pred_check_branch
      %37 = sbr.rel (0) target = $region17
    $region16: #{tpu_custom_call.1} parent=1 // pred_region
      %39 = dma.done [#allocation4], 128
    $region17: #{tpu_custom_call.1} parent=1 // pred_fallthru
      _
    %40 = vsyncpa [#allocation3], 1
    %41 = vsyncpa [#allocation4], 1

// kernel: tpu_custom_call.1
$region0: #{tpu_custom_call.1}
  #allocation0 [shape = 'u32[]', space=smem, size = 0x4, offset = 0x4, fixed_abs, tag = 'smem constant byte address 0x4 - core index']
  #allocation1 [shape = 'u32[72,128]{1,0:T(1,128)}', space=vmem, size = 0x9000, scoped, tag = 'internal scratch']
  %s0 = inlined_call_operand.vmem [shape: bf16[128,128], index: 0, kind: input, shape index: {}]
  %s1 = inlined_call_operand.vmem [shape: bf16[128,1], index: 1, kind: input, shape index: {}]
  %s2 = inlined_call_operand.vmem [shape: f32[1,128], index: 2, kind: input, shape index: {}]
  %s3 = inlined_call_operand.vmem [shape: f32[1,128], index: 3, kind: input, shape index: {}]
  %s4 = inlined_call_operand.hbm [shape: bf16[128,128], index: 4, kind: input, shape index: {}]
  %s5 = inlined_call_operand.vmem [shape: f32[1,128], index: 5, kind: input, shape index: {}]
  %s6 = inlined_call_operand.hbm [shape: f32[128,128], index: 6, kind: output, shape index: {}]
  %s7 = sld [smem:[#allocation0]]
  $region38: #{tpu_custom_call.1} parent=0
    _
  %s9 = ssub.s32 1, %s7
  %s10 = scalar_select 0, %s9, %s7
  $region1: #{tpu_custom_call.1} parent=0
    #allocation2 [shape = 'u8[32768]{0}', space=vmem, size = 0x8000, scoped, tag = 'input window, operand 4, single buffered']
    #allocation3 [shape = 's32[1]{0}', space=sflag, size = 0x4, scoped, tag = 'scoped memory for tpu_custom_call.1']
    #allocation4 [shape = 's32[1]{0}', space=sflag, size = 0x4, scoped, tag = 'scoped memory for tpu_custom_call.1']
    #allocation5 [shape = 'u8[65536]{0}', space=vmem, size = 0x10000, scoped, tag = 'output window, operand 0, single buffered']
    %11 = vsyncpa [#allocation3], 0
    %12 = vsyncpa [#allocation4], 0
    // Predicated region
    $region2: #{tpu_custom_call.1} parent=1 // pred_check
      _
    $region3: #{tpu_custom_call.1} parent=1 // pred_check_branch
      %14 = sbr.rel (0) target = $region5
    $region4: #{tpu_custom_call.1} parent=1 // pred_region
      _
    $region5: #{tpu_custom_call.1} parent=1 // pred_fallthru
      _
    // Predicated region
    $region6: #{tpu_custom_call.1} parent=1 // pred_check
      _
    $region7: #{tpu_custom_call.1} parent=1 // pred_check_branch
      %16 = sbr.rel (0) target = $region9
    $region8: #{tpu_custom_call.1} parent=1 // pred_region
      _
    $region9: #{tpu_custom_call.1} parent=1 // pred_fallthru
      _
    // Predicated region
    $region10: #{tpu_custom_call.1} parent=1 // pred_check
      _
    $region11: #{tpu_custom_call.1} parent=1 // pred_check_branch
      %18 = sbr.rel (0) target = $region13
    $region12: #{tpu_custom_call.1} parent=1 // pred_region
      _
    $region13: #{tpu_custom_call.1} parent=1 // pred_fallthru
      _
    // Predicated region
    $region14: #{tpu_custom_call.1} parent=1 // pred_check
      _
    $region15: #{tpu_custom_call.1} parent=1 // pred_check_branch
      %20 = sbr.rel (0) target = $region17
    $region16: #{tpu_custom_call.1} parent=1 // pred_region
      _
    $region17: #{tpu_custom_call.1} parent=1 // pred_fallthru
      _
    // Predicated region
    $region18: #{tpu_custom_call.1} parent=1 // pred_check
      _
    $region19: #{tpu_custom_call.1} parent=1 // pred_check_branch
      %22 = sbr.rel (0) target = $region21
    $region20: #{tpu_custom_call.1} parent=1 // pred_region
      %24 = vsyncadd [#allocation3], 0
      %s25 = sshll.u32 %s4, 4
      %s26 = int_to_ptr.hbm [resolvable:$true] %s25
      %s27 = sshll.u32 [#allocation2], 4
      %s28 = int_to_ptr.vmem [resolvable:$true] %s27
      %33 = dma.hbm_to_vmem [thread:$0]  %s26, 1024, %s28, [#allocation3], 64, 64, 4
    $region21: #{tpu_custom_call.1} parent=1 // pred_fallthru
      _
    // Predicated region
    $region22: #{tpu_custom_call.1} parent=1 // pred_check
      _
    $region23: #{tpu_custom_call.1} parent=1 // pred_check_branch
      %35 = sbr.rel (0) target = $region25
    $region24: #{tpu_custom_call.1} parent=1 // pred_region
      _
    $region25: #{tpu_custom_call.1} parent=1 // pred_fallthru
      _
    // Predicated region
    $region26: #{tpu_custom_call.1} parent=1 // pred_check
      _
    $region27: #{tpu_custom_call.1} parent=1 // pred_check_branch
      %37 = sbr.rel (0) target = $region29
    $region28: #{tpu_custom_call.1} parent=1 // pred_region
      %39 = dma.done [#allocation3], 1024
    $region29: #{tpu_custom_call.1} parent=1 // pred_fallthru
      _
    %v40 = vld [vmem:[%s0] sm:$0xf]
    %v41 = vld [vmem:[%s0 + $0x4] sm:$0xf]
    %v42 = vld [vmem:[%s0 + $0x8] sm:$0xf]
    %v43 = vld [vmem:[%s0 + $0xc] sm:$0xf]
    %v44 = vld [vmem:[%s0 + $0x10] sm:$0xf]
    %v45 = vld [vmem:[%s0 + $0x14] sm:$0xf]
    %v46 = vld [vmem:[%s0 + $0x18] sm:$0xf]
    %v47 = vld [vmem:[%s0 + $0x1c] sm:$0xf]
    %v48 = vld [vmem:[%s0 + $0x20] sm:$0xf]
    %v49 = vld [vmem:[%s0 + $0x24] sm:$0xf]
    %v50 = vld [vmem:[%s0 + $0x28] sm:$0xf]
    %v51 = vld [vmem:[%s0 + $0x2c] sm:$0xf]
    %v52 = vld [vmem:[%s0 + $0x30] sm:$0xf]
    %v53 = vld [vmem:[%s0 + $0x34] sm:$0xf]
    %v54 = vld [vmem:[%s0 + $0x38] sm:$0xf]
    %v55 = vld [vmem:[%s0 + $0x3c] sm:$0xf]
    %v56 = vld [vmem:[%s1] sm:$0xf]
    %v57 = vld [vmem:[%s1 + $0x4] sm:$0xf]
    %v58 = vld [vmem:[%s1 + $0x8] sm:$0xf]
    %v59 = vld [vmem:[%s1 + $0xc] sm:$0xf]
    %v60 = vld [vmem:[%s1 + $0x10] sm:$0xf]
    %v61 = vld [vmem:[%s1 + $0x14] sm:$0xf]
    %v62 = vld [vmem:[%s1 + $0x18] sm:$0xf]
    %v63 = vld [vmem:[%s1 + $0x1c] sm:$0xf]
    %v64 = vld [vmem:[%s1 + $0x20] sm:$0xf]
    %v65 = vld [vmem:[%s1 + $0x24] sm:$0xf]
    %v66 = vld [vmem:[%s1 + $0x28] sm:$0xf]
    %v67 = vld [vmem:[%s1 + $0x2c] sm:$0xf]
    %v68 = vld [vmem:[%s1 + $0x30] sm:$0xf]
    %v69 = vld [vmem:[%s1 + $0x34] sm:$0xf]
    %v70 = vld [vmem:[%s1 + $0x38] sm:$0xf]
    %v71 = vld [vmem:[%s1 + $0x3c] sm:$0xf]
    %v88 = vunpack.c.l.b16 %v40
    %v89 = vunpack.c.l.b16 %v41
    %v90 = vunpack.c.l.b16 %v42
    %v91 = vunpack.c.l.b16 %v43
    %v92 = vunpack.c.l.b16 %v44
    %v93 = vunpack.c.l.b16 %v45
    %v94 = vunpack.c.l.b16 %v46
    %v95 = vunpack.c.l.b16 %v47
    %v96 = vunpack.c.l.b16 %v48
    %v97 = vunpack.c.l.b16 %v49
    %v98 = vunpack.c.l.b16 %v50
    %v99 = vunpack.c.l.b16 %v51
    %v100 = vunpack.c.l.b16 %v52
    %v101 = vunpack.c.l.b16 %v53
    %v102 = vunpack.c.l.b16 %v54
    %v103 = vunpack.c.l.b16 %v55
    %v104 = vpack.c.b16 %v89, %v88
    %v105 = vpack.c.b16 %v91, %v90
    %v106 = vpack.c.b16 %v93, %v92
    %v107 = vpack.c.b16 %v95, %v94
    %v108 = vpack.c.b16 %v97, %v96
    %v109 = vpack.c.b16 %v99, %v98
    %v110 = vpack.c.b16 %v101, %v100
    %v111 = vpack.c.b16 %v103, %v102
    %v136 = vunpack.c.l.b16 %v56
    %v137 = vunpack.c.l.b16 %v57
    %v138 = vunpack.c.l.b16 %v58
    %v139 = vunpack.c.l.b16 %v59
    %v140 = vunpack.c.l.b16 %v60
    %v141 = vunpack.c.l.b16 %v61
    %v142 = vunpack.c.l.b16 %v62
    %v143 = vunpack.c.l.b16 %v63
    %v144 = vunpack.c.l.b16 %v64
    %v145 = vunpack.c.l.b16 %v65
    %v146 = vunpack.c.l.b16 %v66
    %v147 = vunpack.c.l.b16 %v67
    %v148 = vunpack.c.l.b16 %v68
    %v149 = vunpack.c.l.b16 %v69
    %v150 = vunpack.c.l.b16 %v70
    %v151 = vunpack.c.l.b16 %v71
    %v152 = vpack.c.b16 %v137, %v136
    %v153 = vpack.c.b16 %v139, %v138
    %v154 = vpack.c.b16 %v141, %v140
    %v155 = vpack.c.b16 %v143, %v142
    %v156 = vpack.c.b16 %v145, %v144
    %v157 = vpack.c.b16 %v147, %v146
    %v158 = vpack.c.b16 %v149, %v148
    %v159 = vpack.c.b16 %v151, %v150
    %168 = vmatpush.bf16.msra.mxu0 %v159
    %169 = vmatpush.bf16.msra.mxu0 %v158
    %170 = vmatpush.bf16.msra.mxu0 %v157
    %171 = vmatpush.bf16.msra.mxu0 %v156
    %172 = vmatpush.bf16.msra.mxu0 %v155
    %173 = vmatpush.bf16.msra.mxu0 %v154
    %174 = vmatpush.bf16.msra.mxu0 %v153
    %175 = vmatpush.bf16.msra.mxu0 %v152
    %176 = vmatmul.bf16.gmra.mxu0 %v104
    %v177 = vpop.f32.mrf.mxu0
    %v178 = vadd.f32 0.0, %v177
    %v179 = vpop.f32.mrf.mxu0
    %v180 = vadd.f32 0.0, %v179
    %181 = vmatmul.bf16.gmra.mxu0 %v105
    %v182 = vpop.f32.mrf.mxu0
    %v183 = vadd.f32 0.0, %v182
    %v184 = vpop.f32.mrf.mxu0
    %v185 = vadd.f32 0.0, %v184
    %186 = vmatmul.bf16.gmra.mxu0 %v106
    %v187 = vpop.f32.mrf.mxu0
    %v188 = vadd.f32 0.0, %v187
    %v189 = vpop.f32.mrf.mxu0
    %v190 = vadd.f32 0.0, %v189
    %191 = vmatmul.bf16.gmra.mxu0 %v107
    %v192 = vpop.f32.mrf.mxu0
    %v193 = vadd.f32 0.0, %v192
    %v194 = vpop.f32.mrf.mxu0
    %v195 = vadd.f32 0.0, %v194
    %196 = vmatmul.bf16.gmra.mxu0 %v108
    %v197 = vpop.f32.mrf.mxu0
    %v198 = vadd.f32 0.0, %v197
    %v199 = vpop.f32.mrf.mxu0
    %v200 = vadd.f32 0.0, %v199
    %201 = vmatmul.bf16.gmra.mxu0 %v109
    %v202 = vpop.f32.mrf.mxu0
    %v203 = vadd.f32 0.0, %v202
    %v204 = vpop.f32.mrf.mxu0
    %v205 = vadd.f32 0.0, %v204
    %206 = vmatmul.bf16.gmra.mxu0 %v110
    %v207 = vpop.f32.mrf.mxu0
    %v208 = vadd.f32 0.0, %v207
    %v209 = vpop.f32.mrf.mxu0
    %v210 = vadd.f32 0.0, %v209
    %211 = vmatmul.bf16.gmra.mxu0 %v111
    %v212 = vpop.f32.mrf.mxu0
    %v213 = vadd.f32 0.0, %v212
    %v214 = vpop.f32.mrf.mxu0
    %v215 = vadd.f32 0.0, %v214
    %216 = vdwg.mxu0
    %v217 = vld [vmem:[%s2] sm:$0x1]
    %219 = vset.pattern.permute.xlu0 0
    %220 = vperm.xlu0 %219, %v178
    %v221 = vpop.permute.xlu0 %220
    %224 = vset.pattern.permute.xlu0 0
    %225 = vperm.xlu0 %224, %v180
    %v226 = vpop.permute.xlu0 %225
    %229 = vset.pattern.permute.xlu0 0
    %230 = vperm.xlu0 %229, %v183
    %v231 = vpop.permute.xlu0 %230
    %234 = vset.pattern.permute.xlu0 0
    %235 = vperm.xlu0 %234, %v185
    %v236 = vpop.permute.xlu0 %235
    %239 = vset.pattern.permute.xlu0 0
    %240 = vperm.xlu0 %239, %v188
    %v241 = vpop.permute.xlu0 %240
    %244 = vset.pattern.permute.xlu0 0
    %245 = vperm.xlu0 %244, %v190
    %v246 = vpop.permute.xlu0 %245
    %249 = vset.pattern.permute.xlu0 0
    %250 = vperm.xlu0 %249, %v193
    %v251 = vpop.permute.xlu0 %250
    %254 = vset.pattern.permute.xlu0 0
    %255 = vperm.xlu0 %254, %v195
    %v256 = vpop.permute.xlu0 %255
    %259 = vset.pattern.permute.xlu0 0
    %260 = vperm.xlu0 %259, %v198
    %v261 = vpop.permute.xlu0 %260
    %264 = vset.pattern.permute.xlu0 0
    %265 = vperm.xlu0 %264, %v200
    %v266 = vpop.permute.xlu0 %265
    %269 = vset.pattern.permute.xlu0 0
    %270 = vperm.xlu0 %269, %v203
    %v271 = vpop.permute.xlu0 %270
    %274 = vset.pattern.permute.xlu0 0
    %275 = vperm.xlu0 %274, %v205
    %v276 = vpop.permute.xlu0 %275
    %279 = vset.pattern.permute.xlu0 0
    %280 = vperm.xlu0 %279, %v208
    %v281 = vpop.permute.xlu0 %280
    %284 = vset.pattern.permute.xlu0 0
    %285 = vperm.xlu0 %284, %v210
    %v286 = vpop.permute.xlu0 %285
    %289 = vset.pattern.permute.xlu0 0
    %290 = vperm.xlu0 %289, %v213
    %v291 = vpop.permute.xlu0 %290
    %294 = vset.pattern.permute.xlu0 0
    %295 = vperm.xlu0 %294, %v215
    %v296 = vpop.permute.xlu0 %295
    %v299 = vperm.slane %v217, 0
    %v301 = vmul.f32 %v221, %v299
    %v302 = vmul.f32 %v226, %v299
    %v303 = vmul.f32 %v231, %v299
    %v304 = vmul.f32 %v236, %v299
    %v305 = vmul.f32 %v241, %v299
    %v306 = vmul.f32 %v246, %v299
    %v307 = vmul.f32 %v251, %v299
    %v308 = vmul.f32 %v256, %v299
    %v309 = vmul.f32 %v261, %v299
    %v310 = vmul.f32 %v266, %v299
    %v311 = vmul.f32 %v271, %v299
    %v312 = vmul.f32 %v276, %v299
    %v313 = vmul.f32 %v281, %v299
    %v314 = vmul.f32 %v286, %v299
    %v315 = vmul.f32 %v291, %v299
    %v316 = vmul.f32 %v296, %v299
    %v317 = vld [vmem:[%s3] sm:$0x1]
    %v319 = vperm.slane %v317, 0
    %v321 = vadd.f32 %v301, %v319
    %v322 = vadd.f32 %v302, %v319
    %v323 = vadd.f32 %v303, %v319
    %v324 = vadd.f32 %v304, %v319
    %v325 = vadd.f32 %v305, %v319
    %v326 = vadd.f32 %v306, %v319
    %v327 = vadd.f32 %v307, %v319
    %v328 = vadd.f32 %v308, %v319
    %v329 = vadd.f32 %v309, %v319
    %v330 = vadd.f32 %v310, %v319
    %v331 = vadd.f32 %v311, %v319
    %v332 = vadd.f32 %v312, %v319
    %v333 = vadd.f32 %v313, %v319
    %v334 = vadd.f32 %v314, %v319
    %v335 = vadd.f32 %v315, %v319
    %v336 = vadd.f32 %v316, %v319
    %v337 = vmax.f32 %v321, 0.0
    %v338 = vmax.f32 %v322, 0.0
    %v339 = vmax.f32 %v323, 0.0
    %v340 = vmax.f32 %v324, 0.0
    %v341 = vmax.f32 %v325, 0.0
    %v342 = vmax.f32 %v326, 0.0
    %v343 = vmax.f32 %v327, 0.0
    %v344 = vmax.f32 %v328, 0.0
    %v345 = vmax.f32 %v329, 0.0
    %v346 = vmax.f32 %v330, 0.0
    %v347 = vmax.f32 %v331, 0.0
    %v348 = vmax.f32 %v332, 0.0
    %v349 = vmax.f32 %v333, 0.0
    %v350 = vmax.f32 %v334, 0.0
    %v351 = vmax.f32 %v335, 0.0
    %v352 = vmax.f32 %v336, 0.0
    %v353 = vpack.c.bf16 %v338, %v337
    %v354 = vpack.c.bf16 %v340, %v339
    %v355 = vpack.c.bf16 %v342, %v341
    %v356 = vpack.c.bf16 %v344, %v343
    %v357 = vpack.c.bf16 %v346, %v345
    %v358 = vpack.c.bf16 %v348, %v347
    %v359 = vpack.c.bf16 %v350, %v349
    %v360 = vpack.c.bf16 %v352, %v351
    %v361 = vld [vmem:[#allocation2] sm:$0xf]
    %v362 = vld [vmem:[#allocation2 + $0x4] sm:$0xf]
    %v363 = vld [vmem:[#allocation2 + $0x8] sm:$0xf]
    %v364 = vld [vmem:[#allocation2 + $0xc] sm:$0xf]
    %v365 = vld [vmem:[#allocation2 + $0x10] sm:$0xf]
    %v366 = vld [vmem:[#allocation2 + $0x14] sm:$0xf]
    %v367 = vld [vmem:[#allocation2 + $0x18] sm:$0xf]
    %v368 = vld [vmem:[#allocation2 + $0x1c] sm:$0xf]
    %v369 = vld [vmem:[#allocation2 + $0x20] sm:$0xf]
    %v370 = vld [vmem:[#allocation2 + $0x24] sm:$0xf]
    %v371 = vld [vmem:[#allocation2 + $0x28] sm:$0xf]
    %v372 = vld [vmem:[#allocation2 + $0x2c] sm:$0xf]
    %v373 = vld [vmem:[#allocation2 + $0x30] sm:$0xf]
    %v374 = vld [vmem:[#allocation2 + $0x34] sm:$0xf]
    %v375 = vld [vmem:[#allocation2 + $0x38] sm:$0xf]
    %v376 = vld [vmem:[#allocation2 + $0x3c] sm:$0xf]
    %v393 = vunpack.c.l.b16 %v361
    %v394 = vunpack.c.l.b16 %v362
    %v395 = vunpack.c.l.b16 %v363
    %v396 = vunpack.c.l.b16 %v364
    %v397 = vunpack.c.l.b16 %v365
    %v398 = vunpack.c.l.b16 %v366
    %v399 = vunpack.c.l.b16 %v367
    %v400 = vunpack.c.l.b16 %v368
    %v401 = vunpack.c.l.b16 %v369
    %v402 = vunpack.c.l.b16 %v370
    %v403 = vunpack.c.l.b16 %v371
    %v404 = vunpack.c.l.b16 %v372
    %v405 = vunpack.c.l.b16 %v373
    %v406 = vunpack.c.l.b16 %v374
    %v407 = vunpack.c.l.b16 %v375
    %v408 = vunpack.c.l.b16 %v376
    %v409 = vpack.c.b16 %v394, %v393
    %v410 = vpack.c.b16 %v396, %v395
    %v411 = vpack.c.b16 %v398, %v397
    %v412 = vpack.c.b16 %v400, %v399
    %v413 = vpack.c.b16 %v402, %v401
    %v414 = vpack.c.b16 %v404, %v403
    %v415 = vpack.c.b16 %v406, %v405
    %v416 = vpack.c.b16 %v408, %v407
    %425 = vmatpush.bf16.msra.mxu0 %v416
    %426 = vmatpush.bf16.msra.mxu0 %v415
    %427 = vmatpush.bf16.msra.mxu0 %v414
    %428 = vmatpush.bf16.msra.mxu0 %v413
    %429 = vmatpush.bf16.msra.mxu0 %v412
    %430 = vmatpush.bf16.msra.mxu0 %v411
    %431 = vmatpush.bf16.msra.mxu0 %v410
    %432 = vmatpush.bf16.msra.mxu0 %v409
    %433 = vmatmul.bf16.gmra.mxu0 %v353
    %v434 = vpop.f32.mrf.mxu0
    %v435 = vadd.f32 0.0, %v434
    %v436 = vpop.f32.mrf.mxu0
    %v437 = vadd.f32 0.0, %v436
    %438 = vmatmul.bf16.gmra.mxu0 %v354
    %v439 = vpop.f32.mrf.mxu0
    %v440 = vadd.f32 0.0, %v439
    %v441 = vpop.f32.mrf.mxu0
    %v442 = vadd.f32 0.0, %v441
    %443 = vmatmul.bf16.gmra.mxu0 %v355
    %v444 = vpop.f32.mrf.mxu0
    %v445 = vadd.f32 0.0, %v444
    %v446 = vpop.f32.mrf.mxu0
    %v447 = vadd.f32 0.0, %v446
    %448 = vmatmul.bf16.gmra.mxu0 %v356
    %v449 = vpop.f32.mrf.mxu0
    %v450 = vadd.f32 0.0, %v449
    %v451 = vpop.f32.mrf.mxu0
    %v452 = vadd.f32 0.0, %v451
    %453 = vmatmul.bf16.gmra.mxu0 %v357
    %v454 = vpop.f32.mrf.mxu0
    %v455 = vadd.f32 0.0, %v454
    %v456 = vpop.f32.mrf.mxu0
    %v457 = vadd.f32 0.0, %v456
    %458 = vmatmul.bf16.gmra.mxu0 %v358
    %v459 = vpop.f32.mrf.mxu0
    %v460 = vadd.f32 0.0, %v459
    %v461 = vpop.f32.mrf.mxu0
    %v462 = vadd.f32 0.0, %v461
    %463 = vmatmul.bf16.gmra.mxu0 %v359
    %v464 = vpop.f32.mrf.mxu0
    %v465 = vadd.f32 0.0, %v464
    %v466 = vpop.f32.mrf.mxu0
    %v467 = vadd.f32 0.0, %v466
    %468 = vmatmul.bf16.gmra.mxu0 %v360
    %v469 = vpop.f32.mrf.mxu0
    %v470 = vadd.f32 0.0, %v469
    %v471 = vpop.f32.mrf.mxu0
    %v472 = vadd.f32 0.0, %v471
    %473 = vdwg.mxu0
    %v474 = vpack.c.bf16 %v437, %v435
    %v475 = vpack.c.bf16 %v442, %v440
    %v476 = vpack.c.bf16 %v447, %v445
    %v477 = vpack.c.bf16 %v452, %v450
    %v478 = vpack.c.bf16 %v457, %v455
    %v479 = vpack.c.bf16 %v462, %v460
    %v480 = vpack.c.bf16 %v467, %v465
    %v481 = vpack.c.bf16 %v472, %v470
    %v482 = vld [vmem:[%s5] sm:$0x1]
    %v484 = vperm.slane %v482, 0
    %486 = vmatpush.bf16.msra.mxu0 %v481
    %487 = vmatpush.bf16.msra.mxu0 %v480
    %488 = vmatpush.bf16.msra.mxu0 %v479
    %489 = vmatpush.bf16.msra.mxu0 %v478
    %490 = vmatpush.bf16.msra.mxu0 %v477
    %491 = vmatpush.bf16.msra.mxu0 %v476
    %492 = vmatpush.bf16.msra.mxu0 %v475
    %493 = vmatpush.bf16.msra.mxu0 %v474
    %494 = vmatmul.bf16.gmra.mxu0 %v104
    %v495 = vpop.f32.mrf.mxu0
    %v496 = vadd.f32 %v484, %v495
    %v497 = vpop.f32.mrf.mxu0
    %v498 = vadd.f32 %v484, %v497
    %499 = vmatmul.bf16.gmra.mxu0 %v105
    %v500 = vpop.f32.mrf.mxu0
    %v501 = vadd.f32 %v484, %v500
    %v502 = vpop.f32.mrf.mxu0
    %v503 = vadd.f32 %v484, %v502
    %504 = vmatmul.bf16.gmra.mxu0 %v106
    %v505 = vpop.f32.mrf.mxu0
    %v506 = vadd.f32 %v484, %v505
    %v507 = vpop.f32.mrf.mxu0
    %v508 = vadd.f32 %v484, %v507
    %509 = vmatmul.bf16.gmra.mxu0 %v107
    %v510 = vpop.f32.mrf.mxu0
    %v511 = vadd.f32 %v484, %v510
    %v512 = vpop.f32.mrf.mxu0
    %v513 = vadd.f32 %v484, %v512
    %514 = vmatmul.bf16.gmra.mxu0 %v108
    %v515 = vpop.f32.mrf.mxu0
    %v516 = vadd.f32 %v484, %v515
    %v517 = vpop.f32.mrf.mxu0
    %v518 = vadd.f32 %v484, %v517
    %519 = vmatmul.bf16.gmra.mxu0 %v109
    %v520 = vpop.f32.mrf.mxu0
    %v521 = vadd.f32 %v484, %v520
    %v522 = vpop.f32.mrf.mxu0
    %v523 = vadd.f32 %v484, %v522
    %524 = vmatmul.bf16.gmra.mxu0 %v110
    %v525 = vpop.f32.mrf.mxu0
    %v526 = vadd.f32 %v484, %v525
    %v527 = vpop.f32.mrf.mxu0
    %v528 = vadd.f32 %v484, %v527
    %529 = vmatmul.bf16.gmra.mxu0 %v111
    %v530 = vpop.f32.mrf.mxu0
    %v531 = vadd.f32 %v484, %v530
    %v532 = vpop.f32.mrf.mxu0
    %v533 = vadd.f32 %v484, %v532
    %534 = vdwg.mxu0
    %535 = vst [vmem:[#allocation5] sm:$0xff] %v496
    %536 = vst [vmem:[#allocation5 + $0x8] sm:$0xff] %v498
    %537 = vst [vmem:[#allocation5 + $0x10] sm:$0xff] %v501
    %538 = vst [vmem:[#allocation5 + $0x18] sm:$0xff] %v503
    %539 = vst [vmem:[#allocation5 + $0x20] sm:$0xff] %v506
    %540 = vst [vmem:[#allocation5 + $0x28] sm:$0xff] %v508
    %541 = vst [vmem:[#allocation5 + $0x30] sm:$0xff] %v511
    %542 = vst [vmem:[#allocation5 + $0x38] sm:$0xff] %v513
    %543 = vst [vmem:[#allocation5 + $0x40] sm:$0xff] %v516
    %544 = vst [vmem:[#allocation5 + $0x48] sm:$0xff] %v518
    %545 = vst [vmem:[#allocation5 + $0x50] sm:$0xff] %v521
    %546 = vst [vmem:[#allocation5 + $0x58] sm:$0xff] %v523
    %547 = vst [vmem:[#allocation5 + $0x60] sm:$0xff] %v526
    %548 = vst [vmem:[#allocation5 + $0x68] sm:$0xff] %v528
    %549 = vst [vmem:[#allocation5 + $0x70] sm:$0xff] %v531
    %550 = vst [vmem:[#allocation5 + $0x78] sm:$0xff] %v533
    // Predicated region
    $region30: #{tpu_custom_call.1} parent=1 // pred_check
      _
    $region31: #{tpu_custom_call.1} parent=1 // pred_check_branch
      %552 = sbr.rel (0) target = $region33
    $region32: #{tpu_custom_call.1} parent=1 // pred_region
      %554 = vsyncadd [#allocation4], 0
      %s555 = sshll.u32 [#allocation5], 4
      %s556 = int_to_ptr.vmem [resolvable:$true] %s555
      %s557 = sshll.u32 %s6, 4
      %s558 = int_to_ptr.hbm [resolvable:$true] %s557
      %563 = dma.vmem_to_hbm [thread:$0]  %s556, 2048, %s558, [#allocation4], 128, 128, 8
    $region33: #{tpu_custom_call.1} parent=1 // pred_fallthru
      _
    // Predicated region
    $region34: #{tpu_custom_call.1} parent=1 // pred_check
      _
    $region35: #{tpu_custom_call.1} parent=1 // pred_check_branch
      %565 = sbr.rel (0) target = $region37
    $region36: #{tpu_custom_call.1} parent=1 // pred_region
      %567 = dma.done [#allocation4], 2048
    $region37: #{tpu_custom_call.1} parent=1 // pred_fallthru
      _
    %568 = vsyncpa [#allocation3], 1
    %569 = vsyncpa [#allocation4], 1

</llo_original>
